<compile_context>
chip_gen: v7x
topology: tpu7x:2x2x1
jax: 0.10.0
libtpu: 0.0.40
codegen_flags: <defaults>
</compile_context>

<pallas_src>
import functools

import jax
import jax.numpy as jnp
from jax.experimental import pallas as pl
from jax.experimental.pallas import tpu as pltpu


def _relu_meanpool_kernel(x_ref, o_ref, acc_ref, *, hw, tile_s, inv_hw, mask_tail):
    """One (row-tile i, spatial-tile k) grid step.

    x_ref:   (tile_r, tile_s)  input block (any float dtype)
    o_ref:   (1, 1, tile_r)    lane-dense output block, resident across k
    acc_ref: (8, tile_r)       f32 accumulator scratch (row 0 is the result)
    """
    k = pl.program_id(1)

    @pl.when(k == 0)
    def _init():
        acc_ref[...] = jnp.zeros_like(acc_ref)

    # ReLU on the VPU; accumulate in f32 regardless of input dtype.
    y = jnp.maximum(x_ref[...].astype(jnp.float32), 0.0)

    if mask_tail:
        # Zero out lanes past the true spatial extent on the tail tile.
        col = jax.lax.broadcasted_iota(jnp.int32, y.shape, 1) + k * tile_s
        y = jnp.where(col < hw, y, 0.0)

    # Row-wise spatial sum on the (idle) MXU: ones(8, S) contracted with
    # y(R, S) over S -> (8, R), all rows identical.  This lands the per-row
    # sums on the *lane* axis so the final store is lane-dense.
    ones = jnp.ones((8, y.shape[-1]), dtype=jnp.float32)
    partial = jax.lax.dot_general(
        ones, y,
        dimension_numbers=(((1,), (1,)), ((), ())),
        precision=jax.lax.Precision.HIGHEST,
        preferred_element_type=jnp.float32,
    )
    acc_ref[...] += partial

    @pl.when(k == pl.num_programs(1) - 1)
    def _finalize():
        res = acc_ref[0:1, :] * inv_hw            # scale exactly once
        o_ref[...] = res.astype(o_ref.dtype).reshape(o_ref.shape)


def _pick_tiles(rows: int, hw: int, itemsize: int):
    """Pick (tile_r, tile_s) targeting ~4 MiB input blocks (double-buffered)."""
    target_elems = (4 * 1024 * 1024) // itemsize
    if rows * hw <= target_elems:
        return rows, hw                            # whole array is one small block
    tile_s = hw if hw <= 8192 else 4096            # multiple of 128; tail masked
    tile_r = max(8, min(1024, (target_elems // tile_s) // 8 * 8))
    if tile_r >= rows:
        tile_r = rows
    return tile_r, tile_s


def resnet_encoder_layer(x: jax.Array, *, tile_r: int = None, tile_s: int = None) -> jax.Array:
    """Fused ReLU + spatial mean pooling.

    Args:
      x: (B, C, H, W) float array (f32 or bf16), NCHW.
    Returns:
      (B, C) array (same dtype as x) — per-channel spatial mean of ReLU(x).
    """
    B, C, H, W = x.shape
    rows, hw = B * C, H * W
    x2d = x.reshape(rows, hw)
    itemsize = x2d.dtype.itemsize

    if tile_r is None or tile_s is None:
        auto_r, auto_s = _pick_tiles(rows, hw, itemsize)
        tile_r = auto_r if tile_r is None else tile_r
        tile_s = auto_s if tile_s is None else tile_s

    num_r = pl.cdiv(rows, tile_r)
    num_s = pl.cdiv(hw, tile_s)
    mask_tail = (hw % tile_s) != 0

    kernel = functools.partial(
        _relu_meanpool_kernel,
        hw=hw, tile_s=tile_s, inv_hw=1.0 / float(hw), mask_tail=mask_tail,
    )

    cost = pl.CostEstimate(
        flops=2 * rows * hw,                       # relu + add per element
        transcendentals=0,
        bytes_accessed=rows * hw * itemsize + rows * itemsize,
    )

    out = pl.pallas_call(
        kernel,
        out_shape=jax.ShapeDtypeStruct((num_r, 1, tile_r), x2d.dtype),
        grid_spec=pltpu.PrefetchScalarGridSpec(
            num_scalar_prefetch=0,
            grid=(num_r, num_s),                   # reduction (spatial) axis last
            in_specs=[pl.BlockSpec((tile_r, tile_s), lambda i, k: (i, k))],
            out_specs=pl.BlockSpec((1, 1, tile_r), lambda i, k: (i, 0, 0)),
            scratch_shapes=[pltpu.VMEM((8, tile_r), jnp.float32)],
        ),
        compiler_params=pltpu.CompilerParams(
            dimension_semantics=("parallel", "arbitrary"),
            vmem_limit_bytes=32 * 1024 * 1024,
        ),
        cost_estimate=cost,
    )(x2d)

    # Drop padded tail rows (garbage from partial row-tiles) and reshape.
    return out.reshape(num_r * tile_r)[:rows].reshape(B, C)


if __name__ == "__main__":
    key = jax.random.PRNGKey(0)

    # Test 1: small NCHW input (single-block fast path).
    x = jax.random.normal(key, (2, 4, 16, 16), dtype=jnp.float32)
    out = jax.block_until_ready(resnet_encoder_layer(x))
    ref = jnp.mean(jnp.maximum(x, 0.0), axis=(2, 3))
    assert out.shape == (2, 4)
    assert jnp.allclose(out, ref, atol=1e-4, rtol=1e-4)

    # Test 2: force tiling to exercise row tiling, spatial accumulation,
    # tail masking (240 % 128 != 0) and partial row-tiles (18 % 8 != 0).
    key2 = jax.random.PRNGKey(1)
    x2 = jax.random.normal(key2, (2, 9, 12, 20), dtype=jnp.float32)
    out2 = jax.block_until_ready(resnet_encoder_layer(x2, tile_r=8, tile_s=128))
    ref2 = jnp.mean(jnp.maximum(x2, 0.0), axis=(2, 3))
    assert out2.shape == (2, 9)
    assert jnp.allclose(out2, ref2, atol=1e-4, rtol=1e-4)

    print("KERNEL_OK")
</pallas_src>

<mosaic_0001>
module attributes {stable_mosaic.version = 11 : i64} {
  func.func @_relu_meanpool_kernel(%arg0: i32, %arg1: i32, %arg2: memref<8x256xf32, #tpu.memory_space<vmem>>, %arg3: memref<1x1x8xf32, #tpu.memory_space<vmem>>, %arg4: memref<8x8xf32, #tpu.memory_space<vmem>>) attributes {dimension_semantics = [#tpu.dimension_semantics<parallel>, #tpu.dimension_semantics<arbitrary>], iteration_bounds = array<i64: 1, 1>, scalar_prefetch = 0 : i64, scratch_operands = 1 : i64, tpu.core_type = #tpu.core_type<tc>, window_params = [{transform_indices = @transform_0, window_bounds = array<i64: 8, 256>}, {transform_indices = @transform_1, window_bounds = array<i64: 1, 1, 8>}]} {
    %c0_i32 = arith.constant 0 : i32
    %0 = arith.cmpi eq, %arg1, %c0_i32 : i32
    %1 = arith.extui %0 : i1 to i32
    %c0_i32_0 = arith.constant 0 : i32
    %2 = arith.cmpi ne, %1, %c0_i32_0 : i32
    scf.if %2 {
      %cst_10 = arith.constant 0.000000e+00 : f32
      %14 = vector.broadcast %cst_10 : f32 to vector<8x8xf32>
      %c0_11 = arith.constant 0 : index
      %c0_12 = arith.constant 0 : index
      %15 = vector.load %arg4[%c0_11, %c0_12] : memref<8x8xf32, #tpu.memory_space<vmem>>, vector<8x8xf32>
      tpu.vector_store %arg4[%c0_11, %c0_12], %14 {strides = array<i32>} : memref<8x8xf32, #tpu.memory_space<vmem>>, vector<8x8xf32>,
    } else {
    }
    %c0 = arith.constant 0 : index
    %c0_1 = arith.constant 0 : index
    %3 = vector.load %arg2[%c0, %c0_1] : memref<8x256xf32, #tpu.memory_space<vmem>>, vector<8x256xf32>
    %cst = arith.constant 0.000000e+00 : f32
    %4 = vector.broadcast %cst : f32 to vector<8x256xf32>
    %5 = arith.maximumf %3, %4 : vector<8x256xf32>
    %cst_2 = arith.constant 1.000000e+00 : f32
    %6 = vector.broadcast %cst_2 : f32 to vector<8x256xf32>
    %cst_3 = arith.constant dense<0.000000e+00> : vector<8x8xf32>
    %7 = tpu.matmul %6, %5, %cst_3 {dimension_numbers = #tpu.dot_dimension_numbers<[1], [1], [0], [0], [0, 0, 1, 0], [], []>, precision = #tpu.contract_precision<fp32>} : vector<8x256xf32>, vector<8x256xf32>, vector<8x8xf32> -> vector<8x8xf32>
    %c0_4 = arith.constant 0 : index
    %c0_5 = arith.constant 0 : index
    %8 = vector.load %arg4[%c0_4, %c0_5] : memref<8x8xf32, #tpu.memory_space<vmem>>, vector<8x8xf32>
    %9 = arith.addf %8, %7 : vector<8x8xf32>
    %c0_6 = arith.constant 0 : index
    %c0_7 = arith.constant 0 : index
    %10 = vector.load %arg4[%c0_6, %c0_7] : memref<8x8xf32, #tpu.memory_space<vmem>>, vector<8x8xf32>
    tpu.vector_store %arg4[%c0_6, %c0_7], %9 {strides = array<i32>} : memref<8x8xf32, #tpu.memory_space<vmem>>, vector<8x8xf32>,
    %c0_i32_8 = arith.constant 0 : i32
    %11 = arith.cmpi eq, %arg1, %c0_i32_8 : i32
    %12 = arith.extui %11 : i1 to i32
    %c0_i32_9 = arith.constant 0 : i32
    %13 = arith.cmpi ne, %12, %c0_i32_9 : i32
    scf.if %13 {
      %c0_10 = arith.constant 0 : index
      %c0_11 = arith.constant 0 : index
      %14 = vector.load %arg4[%c0_10, %c0_11] : memref<8x8xf32, #tpu.memory_space<vmem>>, vector<1x8xf32>
      %cst_12 = arith.constant 3.906250e-03 : f32
      %15 = vector.broadcast %cst_12 : f32 to vector<1x8xf32>
      %16 = arith.mulf %14, %15 : vector<1x8xf32>
      %17 = vector.shape_cast %16 : vector<1x8xf32> to vector<1x1x8xf32>
      %c0_13 = arith.constant 0 : index
      %c0_14 = arith.constant 0 : index
      %c0_15 = arith.constant 0 : index
      %18 = vector.load %arg3[%c0_13, %c0_14, %c0_15] : memref<1x1x8xf32, #tpu.memory_space<vmem>>, vector<1x1x8xf32>
      tpu.vector_store %arg3[%c0_13, %c0_14, %c0_15], %17 {strides = array<i32>} : memref<1x1x8xf32, #tpu.memory_space<vmem>>, vector<1x1x8xf32>,
    } else {
    }
    return
  }
  func.func @transform_0(%arg0: i32, %arg1: i32) -> (i32, i32) {
    %c0_i32 = arith.constant 0 : i32
    return %arg0, %arg1 : i32, i32
  }
  func.func @transform_1(%arg0: i32, %arg1: i32) -> (i32, i32, i32) {
    %c0_i32 = arith.constant 0 : i32
    %c0_i32_0 = arith.constant 0 : i32
    %c0_i32_1 = arith.constant 0 : i32
    return %arg0, %c0_i32, %c0_i32_0 : i32, i32, i32
  }
}

</mosaic_0001>

<llo_original>
// kernel: tpu_custom_call.1
$region0: #{tpu_custom_call.1}
  #allocation0 [shape = 'u32[]', space=smem, size = 0x4, offset = 0x4, fixed_abs, tag = 'smem constant byte address 0x4 - core index']
  #allocation1 [shape = 'u32[144,128]{1,0:T(1,128)}', space=vmem, size = 0x12000, scoped, tag = 'internal scratch']
  #allocation2 [shape = 'f32[8,8]{1,0:T(8,128)}', space=vmem, size = 0x1000, scoped, tag = 'scratch operand']
  %s0 = inlined_call_operand.hbm [shape: f32[8,256], index: 0, kind: input, shape index: {}]
  %s1 = inlined_call_operand.hbm [shape: f32[1,1,8], index: 1, kind: output, shape index: {}]
  %s2 = sld [smem:[#allocation0]]
  $region26: #{tpu_custom_call.1} parent=0
    _
  %s4 = ssub.s32 1, %s2
  %s5 = scalar_select 0, %s4, %s2
  $region1: #{tpu_custom_call.1} parent=0
    #allocation3 [shape = 'u8[8192]{0}', space=vmem, size = 0x2000, scoped, tag = 'input window, operand 0, single buffered']
    #allocation4 [shape = 's32[1]{0}', space=sflag, size = 0x4, scoped, tag = 'scoped memory for tpu_custom_call.1']
    #allocation5 [shape = 's32[1]{0}', space=sflag, size = 0x4, scoped, tag = 'scoped memory for tpu_custom_call.1']
    #allocation6 [shape = 'u8[512]{0}', space=vmem, size = 0x400, scoped, tag = 'output window, operand 0, single buffered']
    %6 = vsyncpa [#allocation4], 0
    %7 = vsyncpa [#allocation5], 0
    // Predicated region
    $region2: #{tpu_custom_call.1} parent=1 // pred_check
      _
    $region3: #{tpu_custom_call.1} parent=1 // pred_check_branch
      %9 = sbr.rel (0) target = $region5
    $region4: #{tpu_custom_call.1} parent=1 // pred_region
      %s11 = ssub.s32 256, 256
      %12 = vsyncadd [#allocation4], %s11
      %s14 = sshll.u32 [#allocation3], 4
      %s15 = int_to_ptr.vmem [resolvable:$true] %s14
      %17 = dma.hbm_to_vmem [thread:$0]  %s0, 256, %s15, [#allocation4]
    $region5: #{tpu_custom_call.1} parent=1 // pred_fallthru
      _
    // Predicated region
    $region6: #{tpu_custom_call.1} parent=1 // pred_check
      _
    $region7: #{tpu_custom_call.1} parent=1 // pred_check_branch
      %19 = sbr.rel (0) target = $region9
    $region8: #{tpu_custom_call.1} parent=1 // pred_region
      %20 = dma.done [#allocation4], 256
    $region9: #{tpu_custom_call.1} parent=1 // pred_fallthru
      _
    %p21 = scmp.eq.s32.totalorder 0, 0
    // Predicated region
    $region10: #{tpu_custom_call.1} parent=1 // pred_check
      %p22 = pneg %p21
    $region11: #{tpu_custom_call.1} parent=1 // pred_check_branch
      %24 = sbr.rel (%p22) target = $region13
    $region12: #{tpu_custom_call.1} parent=1 // pred_region
      %vm25 = vcmask 64512
      %26 = vst.msk [vmem:[#allocation2] sm:$0xff] %vm25, 0.0
    $region13: #{tpu_custom_call.1} parent=1 // pred_fallthru
      _
    %v27 = vld [vmem:[#allocation3] sm:$0xff]
    %v28 = vld [vmem:[#allocation3 + $0x8] sm:$0xff]
    %v29 = vmax.f32 %v27, 0.0
    %v30 = vmax.f32 %v28, 0.0
    %v31 = vand.u32 %v30, 4294901760
    %32 = vmatprep.subr.mxu0 %v31
    %v33 = vand.u32 %v29, 4294901760
    %34 = vmatpush1.xpose.msra.mxu0 %v33
    %35 = vmatprep.subr.mxu0 0.0
    %36 = vmatpush1.xpose.msra.mxu0 0.0
    %37 = vmatprep.subr.mxu0 0.0
    %38 = vmatpush1.xpose.msra.mxu0 0.0
    %39 = vmatprep.subr.mxu0 0.0
    %40 = vmatpush1.xpose.msra.mxu0 0.0
    %41 = vmatprep.subr.mxu0 0.0
    %42 = vmatpush1.xpose.msra.mxu0 0.0
    %43 = vmatprep.subr.mxu0 0.0
    %44 = vmatpush1.xpose.msra.mxu0 0.0
    %45 = vmatprep.subr.mxu0 0.0
    %46 = vmatpush1.xpose.msra.mxu0 0.0
    %47 = vmatprep.subr.mxu0 0.0
    %48 = vmatpush1.xpose.msra.mxu0 0.0
    %49 = vmatprep.subr.mxu0 0.0
    %50 = vmatpush1.xpose.msra.mxu0 0.0
    %51 = vmatprep.subr.mxu0 0.0
    %52 = vmatpush1.xpose.msra.mxu0 0.0
    %53 = vmatprep.subr.mxu0 0.0
    %54 = vmatpush1.xpose.msra.mxu0 0.0
    %55 = vmatprep.subr.mxu0 0.0
    %56 = vmatpush1.xpose.msra.mxu0 0.0
    %57 = vmatprep.subr.mxu0 0.0
    %58 = vmatpush1.xpose.msra.mxu0 0.0
    %59 = vmatprep.subr.mxu0 0.0
    %60 = vmatpush1.xpose.msra.mxu0 0.0
    %61 = vmatprep.subr.mxu0 0.0
    %62 = vmatpush1.xpose.msra.mxu0 0.0
    %63 = vmatprep.subr.mxu0 0.0
    %64 = vmatpush1.xpose.msra.mxu0 0.0
    %65 = vmatprep.subr.mxu0 0.0
    %66 = vmatpush1.xpose.msra.mxu0 0.0
    %67 = vmatprep.subr.mxu0 0.0
    %68 = vmatpush1.xpose.msra.mxu0 0.0
    %69 = vmatprep.subr.mxu0 0.0
    %70 = vmatpush1.xpose.msra.mxu0 0.0
    %71 = vmatprep.subr.mxu0 0.0
    %72 = vmatpush1.xpose.msra.mxu0 0.0
    %73 = vmatprep.subr.mxu0 0.0
    %74 = vmatpush1.xpose.msra.mxu0 0.0
    %75 = vmatprep.subr.mxu0 0.0
    %76 = vmatpush1.xpose.msra.mxu0 0.0
    %77 = vmatprep.subr.mxu0 0.0
    %78 = vmatpush1.xpose.msra.mxu0 0.0
    %79 = vmatprep.subr.mxu0 0.0
    %80 = vmatpush1.xpose.msra.mxu0 0.0
    %81 = vmatprep.subr.mxu0 0.0
    %82 = vmatpush1.xpose.msra.mxu0 0.0
    %83 = vmatprep.subr.mxu0 0.0
    %84 = vmatpush1.xpose.msra.mxu0 0.0
    %85 = vmatprep.subr.mxu0 0.0
    %86 = vmatpush1.xpose.msra.mxu0 0.0
    %87 = vmatprep.subr.mxu0 0.0
    %88 = vmatpush1.xpose.msra.mxu0 0.0
    %89 = vmatprep.subr.mxu0 0.0
    %90 = vmatpush1.xpose.msra.mxu0 0.0
    %91 = vmatprep.subr.mxu0 0.0
    %92 = vmatpush1.xpose.msra.mxu0 0.0
    %93 = vmatprep.subr.mxu0 0.0
    %94 = vmatpush1.xpose.msra.mxu0 0.0
    %95 = vmatprep.subr.mxu0 0.0
    %96 = vmatpush1.xpose.msra.mxu0 0.0
    %97 = vmatprep.mubr.f32.mxu0 0.0
    %98 = vmatmul.mubr.f32.gmra.mrb[0].mxu0 0.0
    %v99 = vpop.f32.mrb[0].mxu0
    %v100 = vadd.f32 0.0, %v99
    %v101 = vpop.f32.mrb[0].mxu0
    %102 = vdwg.mxu0
    %v103 = vand.u32 %v30, 4294901760
    %v104 = vsub.f32 %v30, %v103
    %v105 = vand.u32 %v104, 4294901760
    %v106 = vsub.f32 %v104, %v105
    %v107 = vand.u32 %v106, 4294901760
    %108 = vmatprep.subr.mxu0 %v107
    %v109 = vand.u32 %v29, 4294901760
    %v110 = vsub.f32 %v29, %v109
    %v111 = vand.u32 %v110, 4294901760
    %v112 = vsub.f32 %v110, %v111
    %v113 = vand.u32 %v112, 4294901760
    %114 = vmatpush1.xpose.msra.mxu0 %v113
    %115 = vmatprep.subr.mxu0 0.0
    %116 = vmatpush1.xpose.msra.mxu0 0.0
    %117 = vmatprep.subr.mxu0 0.0
    %118 = vmatpush1.xpose.msra.mxu0 0.0
    %119 = vmatprep.subr.mxu0 0.0
    %120 = vmatpush1.xpose.msra.mxu0 0.0
    %121 = vmatprep.subr.mxu0 0.0
    %122 = vmatpush1.xpose.msra.mxu0 0.0
    %123 = vmatprep.subr.mxu0 0.0
    %124 = vmatpush1.xpose.msra.mxu0 0.0
    %125 = vmatprep.subr.mxu0 0.0
    %126 = vmatpush1.xpose.msra.mxu0 0.0
    %127 = vmatprep.subr.mxu0 0.0
    %128 = vmatpush1.xpose.msra.mxu0 0.0
    %129 = vmatprep.subr.mxu0 0.0
    %130 = vmatpush1.xpose.msra.mxu0 0.0
    %131 = vmatprep.subr.mxu0 0.0
    %132 = vmatpush1.xpose.msra.mxu0 0.0
    %133 = vmatprep.subr.mxu0 0.0
    %134 = vmatpush1.xpose.msra.mxu0 0.0
    %135 = vmatprep.subr.mxu0 0.0
    %136 = vmatpush1.xpose.msra.mxu0 0.0
    %137 = vmatprep.subr.mxu0 0.0
    %138 = vmatpush1.xpose.msra.mxu0 0.0
    %139 = vmatprep.subr.mxu0 0.0
    %140 = vmatpush1.xpose.msra.mxu0 0.0
    %141 = vmatprep.subr.mxu0 0.0
    %142 = vmatpush1.xpose.msra.mxu0 0.0
    %143 = vmatprep.subr.mxu0 0.0
    %144 = vmatpush1.xpose.msra.mxu0 0.0
    %145 = vmatprep.subr.mxu0 0.0
    %146 = vmatpush1.xpose.msra.mxu0 0.0
    %147 = vmatprep.subr.mxu0 0.0
    %148 = vmatpush1.xpose.msra.mxu0 0.0
    %149 = vmatprep.subr.mxu0 0.0
    %150 = vmatpush1.xpose.msra.mxu0 0.0
    %151 = vmatprep.subr.mxu0 0.0
    %152 = vmatpush1.xpose.msra.mxu0 0.0
    %153 = vmatprep.subr.mxu0 0.0
    %154 = vmatpush1.xpose.msra.mxu0 0.0
    %155 = vmatprep.subr.mxu0 0.0
    %156 = vmatpush1.xpose.msra.mxu0 0.0
    %157 = vmatprep.subr.mxu0 0.0
    %158 = vmatpush1.xpose.msra.mxu0 0.0
    %159 = vmatprep.subr.mxu0 0.0
    %160 = vmatpush1.xpose.msra.mxu0 0.0
    %161 = vmatprep.subr.mxu0 0.0
    %162 = vmatpush1.xpose.msra.mxu0 0.0
    %163 = vmatprep.subr.mxu0 0.0
    %164 = vmatpush1.xpose.msra.mxu0 0.0
    %165 = vmatprep.subr.mxu0 0.0
    %166 = vmatpush1.xpose.msra.mxu0 0.0
    %167 = vmatprep.subr.mxu0 0.0
    %168 = vmatpush1.xpose.msra.mxu0 0.0
    %169 = vmatprep.subr.mxu0 0.0
    %170 = vmatpush1.xpose.msra.mxu0 0.0
    %171 = vmatprep.subr.mxu0 0.0
    %172 = vmatpush1.xpose.msra.mxu0 0.0
    %173 = vmatprep.subr.mxu0 0.0
    %174 = vmatpush1.xpose.msra.mxu0 0.0
    %175 = vmatprep.subr.mxu0 0.0
    %176 = vmatpush1.xpose.msra.mxu0 0.0
    %177 = vmatprep.mubr.f32.mxu0 1.0
    %178 = vmatmul.mubr.f32.gmra.mrb[0].mxu0 1.0
    %v179 = vpop.f32.mrb[0].mxu0
    %v180 = vadd.f32 %v100, %v179
    %v181 = vpop.f32.mrb[0].mxu0
    %182 = vdwg.mxu0
    %v183 = vand.u32 %v30, 4294901760
    %v184 = vsub.f32 %v30, %v183
    %185 = vmatprep.subr.mxu0 %v184
    %v186 = vand.u32 %v29, 4294901760
    %v187 = vsub.f32 %v29, %v186
    %188 = vmatpush1.xpose.msra.mxu0 %v187
    %189 = vmatprep.subr.mxu0 0.0
    %190 = vmatpush1.xpose.msra.mxu0 0.0
    %191 = vmatprep.subr.mxu0 0.0
    %192 = vmatpush1.xpose.msra.mxu0 0.0
    %193 = vmatprep.subr.mxu0 0.0
    %194 = vmatpush1.xpose.msra.mxu0 0.0
    %195 = vmatprep.subr.mxu0 0.0
    %196 = vmatpush1.xpose.msra.mxu0 0.0
    %197 = vmatprep.subr.mxu0 0.0
    %198 = vmatpush1.xpose.msra.mxu0 0.0
    %199 = vmatprep.subr.mxu0 0.0
    %200 = vmatpush1.xpose.msra.mxu0 0.0
    %201 = vmatprep.subr.mxu0 0.0
    %202 = vmatpush1.xpose.msra.mxu0 0.0
    %203 = vmatprep.subr.mxu0 0.0
    %204 = vmatpush1.xpose.msra.mxu0 0.0
    %205 = vmatprep.subr.mxu0 0.0
    %206 = vmatpush1.xpose.msra.mxu0 0.0
    %207 = vmatprep.subr.mxu0 0.0
    %208 = vmatpush1.xpose.msra.mxu0 0.0
    %209 = vmatprep.subr.mxu0 0.0
    %210 = vmatpush1.xpose.msra.mxu0 0.0
    %211 = vmatprep.subr.mxu0 0.0
    %212 = vmatpush1.xpose.msra.mxu0 0.0
    %213 = vmatprep.subr.mxu0 0.0
    %214 = vmatpush1.xpose.msra.mxu0 0.0
    %215 = vmatprep.subr.mxu0 0.0
    %216 = vmatpush1.xpose.msra.mxu0 0.0
    %217 = vmatprep.subr.mxu0 0.0
    %218 = vmatpush1.xpose.msra.mxu0 0.0
    %219 = vmatprep.subr.mxu0 0.0
    %220 = vmatpush1.xpose.msra.mxu0 0.0
    %221 = vmatprep.subr.mxu0 0.0
    %222 = vmatpush1.xpose.msra.mxu0 0.0
    %223 = vmatprep.subr.mxu0 0.0
    %224 = vmatpush1.xpose.msra.mxu0 0.0
    %225 = vmatprep.subr.mxu0 0.0
    %226 = vmatpush1.xpose.msra.mxu0 0.0
    %227 = vmatprep.subr.mxu0 0.0
    %228 = vmatpush1.xpose.msra.mxu0 0.0
    %229 = vmatprep.subr.mxu0 0.0
    %230 = vmatpush1.xpose.msra.mxu0 0.0
    %231 = vmatprep.subr.mxu0 0.0
    %232 = vmatpush1.xpose.msra.mxu0 0.0
    %233 = vmatprep.subr.mxu0 0.0
    %234 = vmatpush1.xpose.msra.mxu0 0.0
    %235 = vmatprep.subr.mxu0 0.0
    %236 = vmatpush1.xpose.msra.mxu0 0.0
    %237 = vmatprep.subr.mxu0 0.0
    %238 = vmatpush1.xpose.msra.mxu0 0.0
    %239 = vmatprep.subr.mxu0 0.0
    %240 = vmatpush1.xpose.msra.mxu0 0.0
    %241 = vmatprep.subr.mxu0 0.0
    %242 = vmatpush1.xpose.msra.mxu0 0.0
    %243 = vmatprep.subr.mxu0 0.0
    %244 = vmatpush1.xpose.msra.mxu0 0.0
    %245 = vmatprep.subr.mxu0 0.0
    %246 = vmatpush1.xpose.msra.mxu0 0.0
    %247 = vmatprep.subr.mxu0 0.0
    %248 = vmatpush1.xpose.msra.mxu0 0.0
    %249 = vmatprep.subr.mxu0 0.0
    %250 = vmatpush1.xpose.msra.mxu0 0.0
    %251 = vmatprep.mubr.f32.mxu0 0.0
    %252 = vmatmul.mubr.f32.gmra.mrb[0].mxu0 0.0
    %v253 = vpop.f32.mrb[0].mxu0
    %v254 = vadd.f32 %v180, %v253
    %v255 = vpop.f32.mrb[0].mxu0
    %256 = vdwg.mxu0
    %v257 = vand.u32 %v30, 4294901760
    %258 = vmatprep.subr.mxu0 %v257
    %v259 = vand.u32 %v29, 4294901760
    %260 = vmatpush1.xpose.msra.mxu0 %v259
    %261 = vmatprep.subr.mxu0 0.0
    %262 = vmatpush1.xpose.msra.mxu0 0.0
    %263 = vmatprep.subr.mxu0 0.0
    %264 = vmatpush1.xpose.msra.mxu0 0.0
    %265 = vmatprep.subr.mxu0 0.0
    %266 = vmatpush1.xpose.msra.mxu0 0.0
    %267 = vmatprep.subr.mxu0 0.0
    %268 = vmatpush1.xpose.msra.mxu0 0.0
    %269 = vmatprep.subr.mxu0 0.0
    %270 = vmatpush1.xpose.msra.mxu0 0.0
    %271 = vmatprep.subr.mxu0 0.0
    %272 = vmatpush1.xpose.msra.mxu0 0.0
    %273 = vmatprep.subr.mxu0 0.0
    %274 = vmatpush1.xpose.msra.mxu0 0.0
    %275 = vmatprep.subr.mxu0 0.0
    %276 = vmatpush1.xpose.msra.mxu0 0.0
    %277 = vmatprep.subr.mxu0 0.0
    %278 = vmatpush1.xpose.msra.mxu0 0.0
    %279 = vmatprep.subr.mxu0 0.0
    %280 = vmatpush1.xpose.msra.mxu0 0.0
    %281 = vmatprep.subr.mxu0 0.0
    %282 = vmatpush1.xpose.msra.mxu0 0.0
    %283 = vmatprep.subr.mxu0 0.0
    %284 = vmatpush1.xpose.msra.mxu0 0.0
    %285 = vmatprep.subr.mxu0 0.0
    %286 = vmatpush1.xpose.msra.mxu0 0.0
    %287 = vmatprep.subr.mxu0 0.0
    %288 = vmatpush1.xpose.msra.mxu0 0.0
    %289 = vmatprep.subr.mxu0 0.0
    %290 = vmatpush1.xpose.msra.mxu0 0.0
    %291 = vmatprep.subr.mxu0 0.0
    %292 = vmatpush1.xpose.msra.mxu0 0.0
    %293 = vmatprep.subr.mxu0 0.0
    %294 = vmatpush1.xpose.msra.mxu0 0.0
    %295 = vmatprep.subr.mxu0 0.0
    %296 = vmatpush1.xpose.msra.mxu0 0.0
    %297 = vmatprep.subr.mxu0 0.0
    %298 = vmatpush1.xpose.msra.mxu0 0.0
    %299 = vmatprep.subr.mxu0 0.0
    %300 = vmatpush1.xpose.msra.mxu0 0.0
    %301 = vmatprep.subr.mxu0 0.0
    %302 = vmatpush1.xpose.msra.mxu0 0.0
    %303 = vmatprep.subr.mxu0 0.0
    %304 = vmatpush1.xpose.msra.mxu0 0.0
    %305 = vmatprep.subr.mxu0 0.0
    %306 = vmatpush1.xpose.msra.mxu0 0.0
    %307 = vmatprep.subr.mxu0 0.0
    %308 = vmatpush1.xpose.msra.mxu0 0.0
    %309 = vmatprep.subr.mxu0 0.0
    %310 = vmatpush1.xpose.msra.mxu0 0.0
    %311 = vmatprep.subr.mxu0 0.0
    %312 = vmatpush1.xpose.msra.mxu0 0.0
    %313 = vmatprep.subr.mxu0 0.0
    %314 = vmatpush1.xpose.msra.mxu0 0.0
    %315 = vmatprep.subr.mxu0 0.0
    %316 = vmatpush1.xpose.msra.mxu0 0.0
    %317 = vmatprep.subr.mxu0 0.0
    %318 = vmatpush1.xpose.msra.mxu0 0.0
    %319 = vmatprep.subr.mxu0 0.0
    %320 = vmatpush1.xpose.msra.mxu0 0.0
    %321 = vmatprep.subr.mxu0 0.0
    %322 = vmatpush1.xpose.msra.mxu0 0.0
    %323 = vmatprep.mubr.f32.mxu0 0.0
    %324 = vmatmul.mubr.f32.gmra.mrb[0].mxu0 0.0
    %v325 = vpop.f32.mrb[0].mxu0
    %v326 = vadd.f32 %v254, %v325
    %v327 = vpop.f32.mrb[0].mxu0
    %328 = vdwg.mxu0
    %v329 = vand.u32 %v30, 4294901760
    %v330 = vsub.f32 %v30, %v329
    %v331 = vand.u32 %v330, 4294901760
    %332 = vmatprep.subr.mxu0 %v331
    %v333 = vand.u32 %v29, 4294901760
    %v334 = vsub.f32 %v29, %v333
    %v335 = vand.u32 %v334, 4294901760
    %336 = vmatpush1.xpose.msra.mxu0 %v335
    %337 = vmatprep.subr.mxu0 0.0
    %338 = vmatpush1.xpose.msra.mxu0 0.0
    %339 = vmatprep.subr.mxu0 0.0
    %340 = vmatpush1.xpose.msra.mxu0 0.0
    %341 = vmatprep.subr.mxu0 0.0
    %342 = vmatpush1.xpose.msra.mxu0 0.0
    %343 = vmatprep.subr.mxu0 0.0
    %344 = vmatpush1.xpose.msra.mxu0 0.0
    %345 = vmatprep.subr.mxu0 0.0
    %346 = vmatpush1.xpose.msra.mxu0 0.0
    %347 = vmatprep.subr.mxu0 0.0
    %348 = vmatpush1.xpose.msra.mxu0 0.0
    %349 = vmatprep.subr.mxu0 0.0
    %350 = vmatpush1.xpose.msra.mxu0 0.0
    %351 = vmatprep.subr.mxu0 0.0
    %352 = vmatpush1.xpose.msra.mxu0 0.0
    %353 = vmatprep.subr.mxu0 0.0
    %354 = vmatpush1.xpose.msra.mxu0 0.0
    %355 = vmatprep.subr.mxu0 0.0
    %356 = vmatpush1.xpose.msra.mxu0 0.0
    %357 = vmatprep.subr.mxu0 0.0
    %358 = vmatpush1.xpose.msra.mxu0 0.0
    %359 = vmatprep.subr.mxu0 0.0
    %360 = vmatpush1.xpose.msra.mxu0 0.0
    %361 = vmatprep.subr.mxu0 0.0
    %362 = vmatpush1.xpose.msra.mxu0 0.0
    %363 = vmatprep.subr.mxu0 0.0
    %364 = vmatpush1.xpose.msra.mxu0 0.0
    %365 = vmatprep.subr.mxu0 0.0
    %366 = vmatpush1.xpose.msra.mxu0 0.0
    %367 = vmatprep.subr.mxu0 0.0
    %368 = vmatpush1.xpose.msra.mxu0 0.0
    %369 = vmatprep.subr.mxu0 0.0
    %370 = vmatpush1.xpose.msra.mxu0 0.0
    %371 = vmatprep.subr.mxu0 0.0
    %372 = vmatpush1.xpose.msra.mxu0 0.0
    %373 = vmatprep.subr.mxu0 0.0
    %374 = vmatpush1.xpose.msra.mxu0 0.0
    %375 = vmatprep.subr.mxu0 0.0
    %376 = vmatpush1.xpose.msra.mxu0 0.0
    %377 = vmatprep.subr.mxu0 0.0
    %378 = vmatpush1.xpose.msra.mxu0 0.0
    %379 = vmatprep.subr.mxu0 0.0
    %380 = vmatpush1.xpose.msra.mxu0 0.0
    %381 = vmatprep.subr.mxu0 0.0
    %382 = vmatpush1.xpose.msra.mxu0 0.0
    %383 = vmatprep.subr.mxu0 0.0
    %384 = vmatpush1.xpose.msra.mxu0 0.0
    %385 = vmatprep.subr.mxu0 0.0
    %386 = vmatpush1.xpose.msra.mxu0 0.0
    %387 = vmatprep.subr.mxu0 0.0
    %388 = vmatpush1.xpose.msra.mxu0 0.0
    %389 = vmatprep.subr.mxu0 0.0
    %390 = vmatpush1.xpose.msra.mxu0 0.0
    %391 = vmatprep.subr.mxu0 0.0
    %392 = vmatpush1.xpose.msra.mxu0 0.0
    %393 = vmatprep.subr.mxu0 0.0
    %394 = vmatpush1.xpose.msra.mxu0 0.0
    %395 = vmatprep.subr.mxu0 0.0
    %396 = vmatpush1.xpose.msra.mxu0 0.0
    %397 = vmatprep.subr.mxu0 0.0
    %398 = vmatpush1.xpose.msra.mxu0 0.0
    %399 = vmatprep.mubr.f32.mxu0 1.0
    %400 = vmatmul.mubr.f32.gmra.mrb[0].mxu0 1.0
    %v401 = vpop.f32.mrb[0].mxu0
    %v402 = vadd.f32 %v326, %v401
    %v403 = vpop.f32.mrb[0].mxu0
    %404 = vdwg.mxu0
    %v405 = vand.u32 %v30, 4294901760
    %406 = vmatprep.subr.mxu0 %v405
    %v407 = vand.u32 %v29, 4294901760
    %408 = vmatpush1.xpose.msra.mxu0 %v407
    %409 = vmatprep.subr.mxu0 0.0
    %410 = vmatpush1.xpose.msra.mxu0 0.0
    %411 = vmatprep.subr.mxu0 0.0
    %412 = vmatpush1.xpose.msra.mxu0 0.0
    %413 = vmatprep.subr.mxu0 0.0
    %414 = vmatpush1.xpose.msra.mxu0 0.0
    %415 = vmatprep.subr.mxu0 0.0
    %416 = vmatpush1.xpose.msra.mxu0 0.0
    %417 = vmatprep.subr.mxu0 0.0
    %418 = vmatpush1.xpose.msra.mxu0 0.0
    %419 = vmatprep.subr.mxu0 0.0
    %420 = vmatpush1.xpose.msra.mxu0 0.0
    %421 = vmatprep.subr.mxu0 0.0
    %422 = vmatpush1.xpose.msra.mxu0 0.0
    %423 = vmatprep.subr.mxu0 0.0
    %424 = vmatpush1.xpose.msra.mxu0 0.0
    %425 = vmatprep.subr.mxu0 0.0
    %426 = vmatpush1.xpose.msra.mxu0 0.0
    %427 = vmatprep.subr.mxu0 0.0
    %428 = vmatpush1.xpose.msra.mxu0 0.0
    %429 = vmatprep.subr.mxu0 0.0
    %430 = vmatpush1.xpose.msra.mxu0 0.0
    %431 = vmatprep.subr.mxu0 0.0
    %432 = vmatpush1.xpose.msra.mxu0 0.0
    %433 = vmatprep.subr.mxu0 0.0
    %434 = vmatpush1.xpose.msra.mxu0 0.0
    %435 = vmatprep.subr.mxu0 0.0
    %436 = vmatpush1.xpose.msra.mxu0 0.0
    %437 = vmatprep.subr.mxu0 0.0
    %438 = vmatpush1.xpose.msra.mxu0 0.0
    %439 = vmatprep.subr.mxu0 0.0
    %440 = vmatpush1.xpose.msra.mxu0 0.0
    %441 = vmatprep.subr.mxu0 0.0
    %442 = vmatpush1.xpose.msra.mxu0 0.0
    %443 = vmatprep.subr.mxu0 0.0
    %444 = vmatpush1.xpose.msra.mxu0 0.0
    %445 = vmatprep.subr.mxu0 0.0
    %446 = vmatpush1.xpose.msra.mxu0 0.0
    %447 = vmatprep.subr.mxu0 0.0
    %448 = vmatpush1.xpose.msra.mxu0 0.0
    %449 = vmatprep.subr.mxu0 0.0
    %450 = vmatpush1.xpose.msra.mxu0 0.0
    %451 = vmatprep.subr.mxu0 0.0
    %452 = vmatpush1.xpose.msra.mxu0 0.0
    %453 = vmatprep.subr.mxu0 0.0
    %454 = vmatpush1.xpose.msra.mxu0 0.0
    %455 = vmatprep.subr.mxu0 0.0
    %456 = vmatpush1.xpose.msra.mxu0 0.0
    %457 = vmatprep.subr.mxu0 0.0
    %458 = vmatpush1.xpose.msra.mxu0 0.0
    %459 = vmatprep.subr.mxu0 0.0
    %460 = vmatpush1.xpose.msra.mxu0 0.0
    %461 = vmatprep.subr.mxu0 0.0
    %462 = vmatpush1.xpose.msra.mxu0 0.0
    %463 = vmatprep.subr.mxu0 0.0
    %464 = vmatpush1.xpose.msra.mxu0 0.0
    %465 = vmatprep.subr.mxu0 0.0
    %466 = vmatpush1.xpose.msra.mxu0 0.0
    %467 = vmatprep.subr.mxu0 0.0
    %468 = vmatpush1.xpose.msra.mxu0 0.0
    %469 = vmatprep.subr.mxu0 0.0
    %470 = vmatpush1.xpose.msra.mxu0 0.0
    %471 = vmatprep.mubr.f32.mxu0 1.0
    %472 = vmatmul.mubr.f32.gmra.mrb[0].mxu0 1.0
    %v473 = vpop.f32.mrb[0].mxu0
    %v474 = vadd.f32 %v402, %v473
    %v475 = vpop.f32.mrb[0].mxu0
    %476 = vdwg.mxu0
    %v477 = vld [vmem:[#allocation2] sm:$0xff]
    %v478 = vadd.f32 %v477, %v474
    %vm479 = vcmask 64512
    %480 = vst.msk [vmem:[#allocation2] sm:$0xff] %vm479, %v478
    // Predicated region
    $region14: #{tpu_custom_call.1} parent=1 // pred_check
      %p481 = pneg %p21
    $region15: #{tpu_custom_call.1} parent=1 // pred_check_branch
      %483 = sbr.rel (%p481) target = $region17
    $region16: #{tpu_custom_call.1} parent=1 // pred_region
      %v484 = vld [vmem:[#allocation2] sm:$0x1]
      %v485 = vmul.f32 %v484, 0.00390625
      %vm486 = vcmask 57344
      %487 = vst.msk [vmem:[#allocation6] sm:$0x1] %vm486, %v485
    $region17: #{tpu_custom_call.1} parent=1 // pred_fallthru
      _
    // Predicated region
    $region18: #{tpu_custom_call.1} parent=1 // pred_check
      _
    $region19: #{tpu_custom_call.1} parent=1 // pred_check_branch
      %489 = sbr.rel (0) target = $region21
    $region20: #{tpu_custom_call.1} parent=1 // pred_region
      %s491 = ssub.s32 16, 16
      %492 = vsyncadd [#allocation5], %s491
      %s494 = sshll.u32 [#allocation6], 4
      %s495 = int_to_ptr.vmem [resolvable:$true] %s494
      %497 = dma.vmem_to_hbm [thread:$0]  %s495, 16, %s1, [#allocation5]
    $region21: #{tpu_custom_call.1} parent=1 // pred_fallthru
      _
    // Predicated region
    $region22: #{tpu_custom_call.1} parent=1 // pred_check
      _
    $region23: #{tpu_custom_call.1} parent=1 // pred_check_branch
      %499 = sbr.rel (0) target = $region25
    $region24: #{tpu_custom_call.1} parent=1 // pred_region
      %500 = dma.done [#allocation5], 16
    $region25: #{tpu_custom_call.1} parent=1 // pred_fallthru
      _
    %501 = vsyncpa [#allocation4], 1
    %502 = vsyncpa [#allocation5], 1

</llo_original>
